<compile_context>
chip_gen: v5e
topology: v5e:2x2
jax: 0.10.0
libtpu: 0.0.40
codegen_flags: <defaults>
</compile_context>

<pallas_src>
import functools
import math

import jax
import jax.numpy as jnp
from jax import lax
from jax.experimental import pallas as pl
from jax.experimental.pallas import tpu as pltpu

NUM_HEADS = 4
LN_EPS = 1e-5  # PyTorch nn.LayerNorm default


def _tree_sum(xs):
    """Pairwise (tree) sum to avoid a long dependent VPU add chain."""
    xs = list(xs)
    while len(xs) > 1:
        nxt = [xs[i] + xs[i + 1] for i in range(0, len(xs) - 1, 2)]
        if len(xs) % 2:
            nxt.append(xs[-1])
        xs = nxt
    return xs[0]


def highway_kernel(L_ref,            # scalar-prefetch (SMEM): (B,) int32 sequence lengths
                   x_ref,            # (blk_b, S, H) input block
                   ab_ref,           # (H, 2*nh*H) = [A_0|..|A_{nh-1} | B_0|..|B_{nh-1}]
                   c_ref,            # (1, nh*H)   = [bv_0·Wo_0 | ... | bv_{nh-1}·Wo_{nh-1}]
                   w1_ref, w2_ref,   # (H, H) FFN weights (pre-transposed)
                   vec_ref,          # (8, H) rows: bo, alphas, ln1_g, ln1_b, b1, b2, ln2_g, ln2_b
                   o_ref,            # (blk_b, S, H)
                   *, nh, mxu_dtype):
    blk_b, S, H = x_ref.shape
    g = pl.program_id(0)

    def mm(a, b, dims=None):
        # MXU matmul: optionally bf16 operands, always f32 accumulation.
        a = a.astype(mxu_dtype)
        b = b.astype(mxu_dtype)
        if dims is None:
            return jnp.dot(a, b, preferred_element_type=jnp.float32)
        return lax.dot_general(a, b, dims, preferred_element_type=jnp.float32)

    x = x_ref[...].astype(jnp.float32).reshape(blk_b * S, H)             # (R, H)

    vec = vec_ref[...].astype(jnp.float32)                               # (8, H)
    bo, alphas, ln1_g, ln1_b, b1, b2, ln2_g, ln2_b = (
        vec[i:i + 1, :] for i in range(8))

    # Fused per-head projections: one deep, lane-dense matmul for the whole block.
    #   qa[:, h*H:(h+1)*H] = x @ (Wq_h Wk_h^T / sqrt(dk))
    #   vb[:, h*H:(h+1)*H] = x @ (Wv_h Wo_h) + bv_h Wo_h
    qavb = mm(x, ab_ref[...])                                            # (R, 2*nh*H)
    qa = qavb[:, :nh * H]
    vb = qavb[:, nh * H:] + c_ref[...]

    # key-position mask, built once as (1, S) and broadcast inside where()
    key_pos = lax.broadcasted_iota(jnp.int32, (1, S), 1)

    attn_rows = []
    for i in range(blk_b):                                               # static, unrolled
        xb = x[i * S:(i + 1) * S, :]                                     # (S, H)
        valid = key_pos < L_ref[g * blk_b + i]                           # (1, S)
        ctxs = []
        for h in range(nh):                                              # static, unrolled
            qa_h = qa[i * S:(i + 1) * S, h * H:(h + 1) * H]              # (S, H)
            vb_h = vb[i * S:(i + 1) * S, h * H:(h + 1) * H]              # (S, H)
            s = mm(qa_h, xb, (((1,), (1,)), ((), ())))                   # (S, S) = qa_h @ xb.T
            s = jnp.where(valid, s, jnp.float32(-10000.0))               # masked_fill
            s = s - jnp.max(s, axis=-1, keepdims=True)
            e = jnp.exp(s)
            p = e * pl.reciprocal(jnp.sum(e, axis=-1, keepdims=True), approx=True)
            ctxs.append(mm(p, vb_h))                                     # (S, H)
        attn_rows.append(_tree_sum(ctxs) + bo)
    attn = attn_rows[0] if blk_b == 1 else jnp.concatenate(attn_rows, axis=0)

    # highway gate: z * attn + (1 - z) * x
    z = jax.nn.sigmoid(alphas)                                           # (1, H)
    y = z * attn + (1.0 - z) * x

    def layer_norm(v, gamma, beta):
        mu = jnp.mean(v, axis=-1, keepdims=True)
        c = v - mu
        var = jnp.mean(c * c, axis=-1, keepdims=True)
        return c * lax.rsqrt(var + LN_EPS) * gamma + beta

    y = layer_norm(y, ln1_g, ln1_b)

    # residual feed-forward (ReLU)
    h1 = jnp.maximum(mm(y, w1_ref[...]) + b1, 0.0)
    y = mm(h1, w2_ref[...]) + b2 + y

    y = layer_norm(y, ln2_g, ln2_b)

    # TODO(synk): training-mode dropout (on attention probs / block output) not implemented;
    #             this kernel matches eval/inference mode where dropout is identity.
    o_ref[...] = y.reshape(blk_b, S, H).astype(o_ref.dtype)


def _pick_block_batch(B):
    # Amortize the per-grid-step pipeline overhead over several batch elements,
    # but keep at least 2 grid steps so both v7x TensorCores get work.
    if B < 4:
        return 1
    blk = min(8, B // 2)
    while B % blk:
        blk -= 1
    return blk


def highway_block_pallas(x, L, p, *, mxu_dtype=jnp.bfloat16):
    """x: (B, S, H) f32, L: (B,) int, p: dict of PyTorch-convention params."""
    B, S, H = x.shape
    nh = NUM_HEADS
    assert H % nh == 0
    dk = H // nh

    # ---- wrapper-side weight folding (exact; Q/K linears have bias=False) ----
    Wq_t, Wk_t, Wv_t, Wo_t = p["Wq"].T, p["Wk"].T, p["Wv"].T, p["Wo"].T
    inv_sqrt_dk = 1.0 / math.sqrt(dk)
    A_heads, B_heads, c_heads = [], [], []
    for h in range(nh):
        sl = slice(h * dk, (h + 1) * dk)
        Wq_h, Wk_h, Wv_h = Wq_t[:, sl], Wk_t[:, sl], Wv_t[:, sl]
        Wo_h = Wo_t[sl, :]
        A_heads.append((Wq_h @ Wk_h.T) * inv_sqrt_dk)     # (H, H)
        B_heads.append(Wv_h @ Wo_h)                       # (H, H)
        c_heads.append(p["bv"][None, sl] @ Wo_h)          # (1, H)
    ab = jnp.concatenate(A_heads + B_heads, axis=1)       # (H, 2*nh*H)
    c_all = jnp.concatenate(c_heads, axis=1)              # (1, nh*H)

    w1 = p["W1"].T
    w2 = p["W2"].T
    vecs = jnp.stack([p["bo"], p["alphas"], p["ln1_g"], p["ln1_b"],
                      p["b1"], p["b2"], p["ln2_g"], p["ln2_b"]], axis=0)  # (8, H)

    blk_b = _pick_block_batch(B)
    assert B % blk_b == 0
    nblk = B // blk_b

    const2 = lambda shp: pl.BlockSpec(shp, lambda g, Lr: (0, 0))   # grid-invariant: DMA'd once

    grid_spec = pltpu.PrefetchScalarGridSpec(
        num_scalar_prefetch=1,
        grid=(nblk,),
        in_specs=[
            pl.BlockSpec((blk_b, S, H), lambda g, Lr: (g, 0, 0)),  # x block
            const2((H, 2 * nh * H)),                               # fused/folded attn weights
            const2((1, nh * H)),                                   # folded V-bias term
            const2((H, H)), const2((H, H)),                        # W1, W2
            const2((8, H)),                                        # packed per-channel vectors
        ],
        out_specs=pl.BlockSpec((blk_b, S, H), lambda g, Lr: (g, 0, 0)),
    )

    kernel = functools.partial(highway_kernel, nh=nh, mxu_dtype=mxu_dtype)
    return pl.pallas_call(
        kernel,
        grid_spec=grid_spec,
        out_shape=jax.ShapeDtypeStruct((B, S, H), jnp.float32),
        compiler_params=pltpu.CompilerParams(dimension_semantics=("parallel",)),
    )(L.astype(jnp.int32), x, ab, c_all, w1, w2, vecs)


def highway_block_reference(x, L, p):
    """Pure-JAX reference mirroring the PyTorch forward (eval mode)."""
    B, S, H = x.shape
    nh, dk = NUM_HEADS, H // NUM_HEADS

    def ln(y, g, b):
        mu = jnp.mean(y, axis=-1, keepdims=True)
        var = jnp.mean((y - mu) ** 2, axis=-1, keepdims=True)
        return (y - mu) / jnp.sqrt(var + LN_EPS) * g + b

    q = x @ p["Wq"].T
    k = x @ p["Wk"].T
    v = x @ p["Wv"].T + p["bv"]
    split = lambda t: t.reshape(B, S, nh, dk).transpose(0, 2, 1, 3)
    q, k, v = split(q), split(k), split(v)
    scores = jnp.einsum("bhqd,bhkd->bhqk", q, k) / jnp.sqrt(jnp.float32(dk))
    valid = (jnp.arange(S)[None, :] < L[:, None])[:, None, None, :]
    scores = jnp.where(valid, scores, -10000.0)
    probs = jax.nn.softmax(scores, axis=-1)
    out = jnp.einsum("bhqk,bhkd->bhqd", probs, v)
    out = out.transpose(0, 2, 1, 3).reshape(B, S, H)
    y = out @ p["Wo"].T + p["bo"]

    z = jax.nn.sigmoid(p["alphas"])[None, None, :]
    y = z * y + (1.0 - z) * x
    y = ln(y, p["ln1_g"], p["ln1_b"])
    h1 = jax.nn.relu(y @ p["W1"].T + p["b1"])
    y = h1 @ p["W2"].T + p["b2"] + y
    y = ln(y, p["ln2_g"], p["ln2_b"])
    return y


if __name__ == "__main__":
    S, H = 8, 32
    key = jax.random.PRNGKey(0)
    keys = jax.random.split(key, 16)

    # deterministic parameter init (PyTorch weight convention: (out, in))
    p = {
        "Wq": 0.2 * jax.random.normal(keys[1], (H, H), jnp.float32),
        "Wk": 0.2 * jax.random.normal(keys[2], (H, H), jnp.float32),
        "Wv": 0.2 * jax.random.normal(keys[3], (H, H), jnp.float32),
        "bv": 0.1 * jax.random.normal(keys[4], (H,), jnp.float32),
        "Wo": 0.2 * jax.random.normal(keys[5], (H, H), jnp.float32),
        "bo": 0.1 * jax.random.normal(keys[6], (H,), jnp.float32),
        "alphas": jnp.full((H,), -1.0, jnp.float32),   # module init: torch.full(..., -1.0)
        "ln1_g": jnp.ones((H,), jnp.float32),          # nn.LayerNorm defaults
        "ln1_b": jnp.zeros((H,), jnp.float32),
        "W1": 0.2 * jax.random.normal(keys[7], (H, H), jnp.float32),
        "b1": 0.1 * jax.random.normal(keys[8], (H,), jnp.float32),
        "W2": 0.2 * jax.random.normal(keys[9], (H, H), jnp.float32),
        "b2": 0.1 * jax.random.normal(keys[10], (H,), jnp.float32),
        "ln2_g": jnp.ones((H,), jnp.float32),
        "ln2_b": jnp.zeros((H,), jnp.float32),
    }

    cases = [
        (2, jnp.array([8, 5], dtype=jnp.int32)),                    # blk_b=1 -> 2 parallel steps
        (8, jnp.array([8, 5, 3, 8, 1, 6, 8, 2], dtype=jnp.int32)),  # blk_b=4 -> multi-batch blocks
    ]
    for idx, (B, L) in enumerate(cases):
        x = jax.random.normal(jax.random.fold_in(keys[0], idx), (B, S, H), jnp.float32)
        ref = highway_block_reference(x, L, p)

        # exact-semantics path: f32 operands at the MXU
        out = jax.block_until_ready(highway_block_pallas(x, L, p, mxu_dtype=jnp.float32))
        assert out.shape == (B, S, H) and out.dtype == jnp.float32
        err = float(jnp.max(jnp.abs(out - ref)))
        assert jnp.allclose(out, ref, rtol=5e-3, atol=5e-3), (
            f"f32-MXU path B={B}: max abs diff = {err}")

        # optimized path: bf16 operands at the MXU, f32 accumulation (v5e/v6e/v7x win)
        out_bf16 = jax.block_until_ready(highway_block_pallas(x, L, p, mxu_dtype=jnp.bfloat16))
        err16 = float(jnp.max(jnp.abs(out_bf16 - ref)))
        assert jnp.allclose(out_bf16, ref, rtol=1e-1, atol=1e-1), (
            f"bf16-MXU path B={B}: max abs diff = {err16}")

    print("KERNEL_OK")
</pallas_src>

<mosaic_0001>
module attributes {stable_mosaic.version = 11 : i64} {
  func.func @highway_kernel(%arg0: i32, %arg1: memref<2xi32, #tpu.memory_space<smem>>, %arg2: memref<1x8x32xf32, #tpu.memory_space<vmem>>, %arg3: memref<32x256xf32, #tpu.memory_space<vmem>>, %arg4: memref<1x128xf32, #tpu.memory_space<vmem>>, %arg5: memref<32x32xf32, #tpu.memory_space<vmem>>, %arg6: memref<32x32xf32, #tpu.memory_space<vmem>>, %arg7: memref<8x32xf32, #tpu.memory_space<vmem>>, %arg8: memref<1x8x32xf32, #tpu.memory_space<vmem>>) attributes {dimension_semantics = [#tpu.dimension_semantics<parallel>], iteration_bounds = array<i64: 2>, scalar_prefetch = 1 : i64, scratch_operands = 0 : i64, tpu.core_type = #tpu.core_type<tc>, window_params = [{transform_indices = @transform_0, window_bounds = array<i64: 1, 8, 32>}, {pipeline_mode = #tpu.pipeline_mode<synchronous>, transform_indices = @transform_1, window_bounds = array<i64: 32, 256>}, {pipeline_mode = #tpu.pipeline_mode<synchronous>, transform_indices = @transform_2, window_bounds = array<i64: 1, 128>}, {pipeline_mode = #tpu.pipeline_mode<synchronous>, transform_indices = @transform_3, window_bounds = array<i64: 32, 32>}, {pipeline_mode = #tpu.pipeline_mode<synchronous>, transform_indices = @transform_4, window_bounds = array<i64: 32, 32>}, {pipeline_mode = #tpu.pipeline_mode<synchronous>, transform_indices = @transform_5, window_bounds = array<i64: 8, 32>}, {transform_indices = @transform_6, window_bounds = array<i64: 1, 8, 32>}]} {
    %c0 = arith.constant 0 : index
    %c0_0 = arith.constant 0 : index
    %c0_1 = arith.constant 0 : index
    %0 = vector.load %arg2[%c0, %c0_0, %c0_1] : memref<1x8x32xf32, #tpu.memory_space<vmem>>, vector<1x8x32xf32>
    %1 = vector.shape_cast %0 : vector<1x8x32xf32> to vector<8x32xf32>
    %c0_2 = arith.constant 0 : index
    %c0_3 = arith.constant 0 : index
    %2 = vector.load %arg7[%c0_2, %c0_3] : memref<8x32xf32, #tpu.memory_space<vmem>>, vector<8x32xf32>
    %3 = vector.extract_strided_slice %2 {offsets = [0, 0], sizes = [1, 32], strides = [1, 1]} : vector<8x32xf32> to vector<1x32xf32>
    %4 = vector.extract_strided_slice %2 {offsets = [1, 0], sizes = [1, 32], strides = [1, 1]} : vector<8x32xf32> to vector<1x32xf32>
    %5 = vector.extract_strided_slice %2 {offsets = [2, 0], sizes = [1, 32], strides = [1, 1]} : vector<8x32xf32> to vector<1x32xf32>
    %6 = vector.extract_strided_slice %2 {offsets = [3, 0], sizes = [1, 32], strides = [1, 1]} : vector<8x32xf32> to vector<1x32xf32>
    %7 = vector.extract_strided_slice %2 {offsets = [4, 0], sizes = [1, 32], strides = [1, 1]} : vector<8x32xf32> to vector<1x32xf32>
    %8 = vector.extract_strided_slice %2 {offsets = [5, 0], sizes = [1, 32], strides = [1, 1]} : vector<8x32xf32> to vector<1x32xf32>
    %9 = vector.extract_strided_slice %2 {offsets = [6, 0], sizes = [1, 32], strides = [1, 1]} : vector<8x32xf32> to vector<1x32xf32>
    %10 = vector.extract_strided_slice %2 {offsets = [7, 0], sizes = [1, 32], strides = [1, 1]} : vector<8x32xf32> to vector<1x32xf32>
    %c0_4 = arith.constant 0 : index
    %c0_5 = arith.constant 0 : index
    %11 = vector.load %arg3[%c0_4, %c0_5] : memref<32x256xf32, #tpu.memory_space<vmem>>, vector<32x256xf32>
    %cst = arith.constant dense<0.000000e+00> : vector<8x256xf32>
    %12 = tpu.matmul %1, %11, %cst {dimension_numbers = #tpu.dot_dimension_numbers<[1], [0], [0], [1], [0, 0, 1, 1], [], []>} : vector<8x32xf32>, vector<32x256xf32>, vector<8x256xf32> -> vector<8x256xf32>
    %13 = vector.extract_strided_slice %12 {offsets = [0, 0], sizes = [8, 128], strides = [1, 1]} : vector<8x256xf32> to vector<8x128xf32>
    %14 = vector.extract_strided_slice %12 {offsets = [0, 128], sizes = [8, 128], strides = [1, 1]} : vector<8x256xf32> to vector<8x128xf32>
    %c0_6 = arith.constant 0 : index
    %c0_7 = arith.constant 0 : index
    %15 = vector.load %arg4[%c0_6, %c0_7] : memref<1x128xf32, #tpu.memory_space<vmem>>, vector<1x128xf32>
    %16 = vector.broadcast %15 : vector<1x128xf32> to vector<8x128xf32>
    %17 = arith.addf %14, %16 : vector<8x128xf32>
    %18 = tpu.iota {dimensions = array<i32: 1>} : vector<1x8xi32>
    %c1_i32 = arith.constant 1 : i32
    %19 = arith.muli %arg0, %c1_i32 : i32
    %c0_i32 = arith.constant 0 : i32
    %20 = arith.addi %19, %c0_i32 : i32
    %21 = arith.index_cast %20 : i32 to index
    %22 = memref.load %arg1[%21] : memref<2xi32, #tpu.memory_space<smem>>
    %23 = vector.broadcast %22 : i32 to vector<1x8xi32>
    %24 = arith.cmpi slt, %18, %23 : vector<1x8xi32>
    %25 = vector.extract_strided_slice %13 {offsets = [0, 0], sizes = [8, 32], strides = [1, 1]} : vector<8x128xf32> to vector<8x32xf32>
    %26 = vector.extract_strided_slice %17 {offsets = [0, 0], sizes = [8, 32], strides = [1, 1]} : vector<8x128xf32> to vector<8x32xf32>
    %cst_8 = arith.constant dense<0.000000e+00> : vector<8x8xf32>
    %27 = tpu.matmul %25, %1, %cst_8 {dimension_numbers = #tpu.dot_dimension_numbers<[1], [1], [0], [0], [0, 0, 1, 0], [], []>} : vector<8x32xf32>, vector<8x32xf32>, vector<8x8xf32> -> vector<8x8xf32>
    %cst_9 = arith.constant -1.000000e+04 : f32
    %28 = vector.shape_cast %24 : vector<1x8xi1> to vector<1x8xi1>
    %29 = vector.broadcast %28 : vector<1x8xi1> to vector<8x8xi1>
    %30 = vector.broadcast %cst_9 : f32 to vector<8x8xf32>
    %31 = arith.select %29, %27, %30 : vector<8x8xi1>, vector<8x8xf32>
    %cst_10 = arith.constant dense<0xFF800000> : vector<8xf32>
    %32 = vector.multi_reduction <maximumf>, %31, %cst_10 [1] : vector<8x8xf32> to vector<8xf32>
    %33 = vector.shape_cast %32 : vector<8xf32> to vector<8x1xf32>
    %34 = vector.broadcast %33 : vector<8x1xf32> to vector<8x8xf32>
    %35 = arith.subf %31, %34 : vector<8x8xf32>
    %36 = math.exp %35 : vector<8x8xf32>
    %cst_11 = arith.constant dense<0.000000e+00> : vector<8xf32>
    %37 = vector.multi_reduction <add>, %36, %cst_11 [1] : vector<8x8xf32> to vector<8xf32>
    %38 = vector.shape_cast %37 : vector<8xf32> to vector<8x1xf32>
    %39 = tpu.reciprocal %38 {approx = true} : vector<8x1xf32> -> vector<8x1xf32>
    %40 = vector.broadcast %39 : vector<8x1xf32> to vector<8x8xf32>
    %41 = arith.mulf %36, %40 : vector<8x8xf32>
    %cst_12 = arith.constant dense<0.000000e+00> : vector<8x32xf32>
    %42 = tpu.matmul %41, %26, %cst_12 {dimension_numbers = #tpu.dot_dimension_numbers<[1], [0], [0], [1], [0, 0, 1, 1], [], []>} : vector<8x8xf32>, vector<8x32xf32>, vector<8x32xf32> -> vector<8x32xf32>
    %43 = vector.extract_strided_slice %13 {offsets = [0, 32], sizes = [8, 32], strides = [1, 1]} : vector<8x128xf32> to vector<8x32xf32>
    %44 = vector.extract_strided_slice %17 {offsets = [0, 32], sizes = [8, 32], strides = [1, 1]} : vector<8x128xf32> to vector<8x32xf32>
    %cst_13 = arith.constant dense<0.000000e+00> : vector<8x8xf32>
    %45 = tpu.matmul %43, %1, %cst_13 {dimension_numbers = #tpu.dot_dimension_numbers<[1], [1], [0], [0], [0, 0, 1, 0], [], []>} : vector<8x32xf32>, vector<8x32xf32>, vector<8x8xf32> -> vector<8x8xf32>
    %cst_14 = arith.constant -1.000000e+04 : f32
    %46 = vector.shape_cast %24 : vector<1x8xi1> to vector<1x8xi1>
    %47 = vector.broadcast %46 : vector<1x8xi1> to vector<8x8xi1>
    %48 = vector.broadcast %cst_14 : f32 to vector<8x8xf32>
    %49 = arith.select %47, %45, %48 : vector<8x8xi1>, vector<8x8xf32>
    %cst_15 = arith.constant dense<0xFF800000> : vector<8xf32>
    %50 = vector.multi_reduction <maximumf>, %49, %cst_15 [1] : vector<8x8xf32> to vector<8xf32>
    %51 = vector.shape_cast %50 : vector<8xf32> to vector<8x1xf32>
    %52 = vector.broadcast %51 : vector<8x1xf32> to vector<8x8xf32>
    %53 = arith.subf %49, %52 : vector<8x8xf32>
    %54 = math.exp %53 : vector<8x8xf32>
    %cst_16 = arith.constant dense<0.000000e+00> : vector<8xf32>
    %55 = vector.multi_reduction <add>, %54, %cst_16 [1] : vector<8x8xf32> to vector<8xf32>
    %56 = vector.shape_cast %55 : vector<8xf32> to vector<8x1xf32>
    %57 = tpu.reciprocal %56 {approx = true} : vector<8x1xf32> -> vector<8x1xf32>
    %58 = vector.broadcast %57 : vector<8x1xf32> to vector<8x8xf32>
    %59 = arith.mulf %54, %58 : vector<8x8xf32>
    %cst_17 = arith.constant dense<0.000000e+00> : vector<8x32xf32>
    %60 = tpu.matmul %59, %44, %cst_17 {dimension_numbers = #tpu.dot_dimension_numbers<[1], [0], [0], [1], [0, 0, 1, 1], [], []>} : vector<8x8xf32>, vector<8x32xf32>, vector<8x32xf32> -> vector<8x32xf32>
    %61 = vector.extract_strided_slice %13 {offsets = [0, 64], sizes = [8, 32], strides = [1, 1]} : vector<8x128xf32> to vector<8x32xf32>
    %62 = vector.extract_strided_slice %17 {offsets = [0, 64], sizes = [8, 32], strides = [1, 1]} : vector<8x128xf32> to vector<8x32xf32>
    %cst_18 = arith.constant dense<0.000000e+00> : vector<8x8xf32>
    %63 = tpu.matmul %61, %1, %cst_18 {dimension_numbers = #tpu.dot_dimension_numbers<[1], [1], [0], [0], [0, 0, 1, 0], [], []>} : vector<8x32xf32>, vector<8x32xf32>, vector<8x8xf32> -> vector<8x8xf32>
    %cst_19 = arith.constant -1.000000e+04 : f32
    %64 = vector.shape_cast %24 : vector<1x8xi1> to vector<1x8xi1>
    %65 = vector.broadcast %64 : vector<1x8xi1> to vector<8x8xi1>
    %66 = vector.broadcast %cst_19 : f32 to vector<8x8xf32>
    %67 = arith.select %65, %63, %66 : vector<8x8xi1>, vector<8x8xf32>
    %cst_20 = arith.constant dense<0xFF800000> : vector<8xf32>
    %68 = vector.multi_reduction <maximumf>, %67, %cst_20 [1] : vector<8x8xf32> to vector<8xf32>
    %69 = vector.shape_cast %68 : vector<8xf32> to vector<8x1xf32>
    %70 = vector.broadcast %69 : vector<8x1xf32> to vector<8x8xf32>
    %71 = arith.subf %67, %70 : vector<8x8xf32>
    %72 = math.exp %71 : vector<8x8xf32>
    %cst_21 = arith.constant dense<0.000000e+00> : vector<8xf32>
    %73 = vector.multi_reduction <add>, %72, %cst_21 [1] : vector<8x8xf32> to vector<8xf32>
    %74 = vector.shape_cast %73 : vector<8xf32> to vector<8x1xf32>
    %75 = tpu.reciprocal %74 {approx = true} : vector<8x1xf32> -> vector<8x1xf32>
    %76 = vector.broadcast %75 : vector<8x1xf32> to vector<8x8xf32>
    %77 = arith.mulf %72, %76 : vector<8x8xf32>
    %cst_22 = arith.constant dense<0.000000e+00> : vector<8x32xf32>
    %78 = tpu.matmul %77, %62, %cst_22 {dimension_numbers = #tpu.dot_dimension_numbers<[1], [0], [0], [1], [0, 0, 1, 1], [], []>} : vector<8x8xf32>, vector<8x32xf32>, vector<8x32xf32> -> vector<8x32xf32>
    %79 = vector.extract_strided_slice %13 {offsets = [0, 96], sizes = [8, 32], strides = [1, 1]} : vector<8x128xf32> to vector<8x32xf32>
    %80 = vector.extract_strided_slice %17 {offsets = [0, 96], sizes = [8, 32], strides = [1, 1]} : vector<8x128xf32> to vector<8x32xf32>
    %cst_23 = arith.constant dense<0.000000e+00> : vector<8x8xf32>
    %81 = tpu.matmul %79, %1, %cst_23 {dimension_numbers = #tpu.dot_dimension_numbers<[1], [1], [0], [0], [0, 0, 1, 0], [], []>} : vector<8x32xf32>, vector<8x32xf32>, vector<8x8xf32> -> vector<8x8xf32>
    %cst_24 = arith.constant -1.000000e+04 : f32
    %82 = vector.shape_cast %24 : vector<1x8xi1> to vector<1x8xi1>
    %83 = vector.broadcast %82 : vector<1x8xi1> to vector<8x8xi1>
    %84 = vector.broadcast %cst_24 : f32 to vector<8x8xf32>
    %85 = arith.select %83, %81, %84 : vector<8x8xi1>, vector<8x8xf32>
    %cst_25 = arith.constant dense<0xFF800000> : vector<8xf32>
    %86 = vector.multi_reduction <maximumf>, %85, %cst_25 [1] : vector<8x8xf32> to vector<8xf32>
    %87 = vector.shape_cast %86 : vector<8xf32> to vector<8x1xf32>
    %88 = vector.broadcast %87 : vector<8x1xf32> to vector<8x8xf32>
    %89 = arith.subf %85, %88 : vector<8x8xf32>
    %90 = math.exp %89 : vector<8x8xf32>
    %cst_26 = arith.constant dense<0.000000e+00> : vector<8xf32>
    %91 = vector.multi_reduction <add>, %90, %cst_26 [1] : vector<8x8xf32> to vector<8xf32>
    %92 = vector.shape_cast %91 : vector<8xf32> to vector<8x1xf32>
    %93 = tpu.reciprocal %92 {approx = true} : vector<8x1xf32> -> vector<8x1xf32>
    %94 = vector.broadcast %93 : vector<8x1xf32> to vector<8x8xf32>
    %95 = arith.mulf %90, %94 : vector<8x8xf32>
    %cst_27 = arith.constant dense<0.000000e+00> : vector<8x32xf32>
    %96 = tpu.matmul %95, %80, %cst_27 {dimension_numbers = #tpu.dot_dimension_numbers<[1], [0], [0], [1], [0, 0, 1, 1], [], []>} : vector<8x8xf32>, vector<8x32xf32>, vector<8x32xf32> -> vector<8x32xf32>
    %97 = arith.addf %42, %60 : vector<8x32xf32>
    %98 = arith.addf %78, %96 : vector<8x32xf32>
    %99 = arith.addf %97, %98 : vector<8x32xf32>
    %100 = vector.broadcast %3 : vector<1x32xf32> to vector<8x32xf32>
    %101 = arith.addf %99, %100 : vector<8x32xf32>
    %102 = arith.negf %4 : vector<1x32xf32>
    %103 = math.exp %102 : vector<1x32xf32>
    %cst_28 = arith.constant 1.000000e+00 : f32
    %104 = vector.broadcast %cst_28 : f32 to vector<1x32xf32>
    %105 = arith.addf %104, %103 : vector<1x32xf32>
    %106 = arith.divf %104, %105 : vector<1x32xf32>
    %107 = vector.broadcast %106 : vector<1x32xf32> to vector<8x32xf32>
    %108 = arith.mulf %107, %101 : vector<8x32xf32>
    %cst_29 = arith.constant 1.000000e+00 : f32
    %109 = vector.broadcast %cst_29 : f32 to vector<1x32xf32>
    %110 = arith.subf %109, %106 : vector<1x32xf32>
    %111 = vector.broadcast %110 : vector<1x32xf32> to vector<8x32xf32>
    %112 = arith.mulf %111, %1 : vector<8x32xf32>
    %113 = arith.addf %108, %112 : vector<8x32xf32>
    %cst_30 = arith.constant dense<0.000000e+00> : vector<8xf32>
    %114 = vector.multi_reduction <add>, %113, %cst_30 [1] : vector<8x32xf32> to vector<8xf32>
    %115 = vector.shape_cast %114 : vector<8xf32> to vector<8x1xf32>
    %cst_31 = arith.constant 3.200000e+01 : f32
    %116 = vector.broadcast %cst_31 : f32 to vector<8x1xf32>
    %117 = arith.divf %115, %116 : vector<8x1xf32>
    %118 = vector.broadcast %117 : vector<8x1xf32> to vector<8x32xf32>
    %119 = arith.subf %113, %118 : vector<8x32xf32>
    %120 = arith.mulf %119, %119 : vector<8x32xf32>
    %cst_32 = arith.constant dense<0.000000e+00> : vector<8xf32>
    %121 = vector.multi_reduction <add>, %120, %cst_32 [1] : vector<8x32xf32> to vector<8xf32>
    %122 = vector.shape_cast %121 : vector<8xf32> to vector<8x1xf32>
    %cst_33 = arith.constant 3.200000e+01 : f32
    %123 = vector.broadcast %cst_33 : f32 to vector<8x1xf32>
    %124 = arith.divf %122, %123 : vector<8x1xf32>
    %cst_34 = arith.constant 9.99999974E-6 : f32
    %125 = vector.broadcast %cst_34 : f32 to vector<8x1xf32>
    %126 = arith.addf %124, %125 : vector<8x1xf32>
    %127 = math.rsqrt %126 : vector<8x1xf32>
    %128 = vector.broadcast %127 : vector<8x1xf32> to vector<8x32xf32>
    %129 = arith.mulf %119, %128 : vector<8x32xf32>
    %130 = vector.broadcast %5 : vector<1x32xf32> to vector<8x32xf32>
    %131 = arith.mulf %129, %130 : vector<8x32xf32>
    %132 = vector.broadcast %6 : vector<1x32xf32> to vector<8x32xf32>
    %133 = arith.addf %131, %132 : vector<8x32xf32>
    %c0_35 = arith.constant 0 : index
    %c0_36 = arith.constant 0 : index
    %134 = vector.load %arg5[%c0_35, %c0_36] : memref<32x32xf32, #tpu.memory_space<vmem>>, vector<32x32xf32>
    %cst_37 = arith.constant dense<0.000000e+00> : vector<8x32xf32>
    %135 = tpu.matmul %133, %134, %cst_37 {dimension_numbers = #tpu.dot_dimension_numbers<[1], [0], [0], [1], [0, 0, 1, 1], [], []>} : vector<8x32xf32>, vector<32x32xf32>, vector<8x32xf32> -> vector<8x32xf32>
    %136 = vector.broadcast %7 : vector<1x32xf32> to vector<8x32xf32>
    %137 = arith.addf %135, %136 : vector<8x32xf32>
    %cst_38 = arith.constant 0.000000e+00 : f32
    %138 = vector.broadcast %cst_38 : f32 to vector<8x32xf32>
    %139 = arith.maximumf %137, %138 : vector<8x32xf32>
    %c0_39 = arith.constant 0 : index
    %c0_40 = arith.constant 0 : index
    %140 = vector.load %arg6[%c0_39, %c0_40] : memref<32x32xf32, #tpu.memory_space<vmem>>, vector<32x32xf32>
    %cst_41 = arith.constant dense<0.000000e+00> : vector<8x32xf32>
    %141 = tpu.matmul %139, %140, %cst_41 {dimension_numbers = #tpu.dot_dimension_numbers<[1], [0], [0], [1], [0, 0, 1, 1], [], []>} : vector<8x32xf32>, vector<32x32xf32>, vector<8x32xf32> -> vector<8x32xf32>
    %142 = vector.broadcast %8 : vector<1x32xf32> to vector<8x32xf32>
    %143 = arith.addf %141, %142 : vector<8x32xf32>
    %144 = arith.addf %143, %133 : vector<8x32xf32>
    %cst_42 = arith.constant dense<0.000000e+00> : vector<8xf32>
    %145 = vector.multi_reduction <add>, %144, %cst_42 [1] : vector<8x32xf32> to vector<8xf32>
    %146 = vector.shape_cast %145 : vector<8xf32> to vector<8x1xf32>
    %cst_43 = arith.constant 3.200000e+01 : f32
    %147 = vector.broadcast %cst_43 : f32 to vector<8x1xf32>
    %148 = arith.divf %146, %147 : vector<8x1xf32>
    %149 = vector.broadcast %148 : vector<8x1xf32> to vector<8x32xf32>
    %150 = arith.subf %144, %149 : vector<8x32xf32>
    %151 = arith.mulf %150, %150 : vector<8x32xf32>
    %cst_44 = arith.constant dense<0.000000e+00> : vector<8xf32>
    %152 = vector.multi_reduction <add>, %151, %cst_44 [1] : vector<8x32xf32> to vector<8xf32>
    %153 = vector.shape_cast %152 : vector<8xf32> to vector<8x1xf32>
    %cst_45 = arith.constant 3.200000e+01 : f32
    %154 = vector.broadcast %cst_45 : f32 to vector<8x1xf32>
    %155 = arith.divf %153, %154 : vector<8x1xf32>
    %cst_46 = arith.constant 9.99999974E-6 : f32
    %156 = vector.broadcast %cst_46 : f32 to vector<8x1xf32>
    %157 = arith.addf %155, %156 : vector<8x1xf32>
    %158 = math.rsqrt %157 : vector<8x1xf32>
    %159 = vector.broadcast %158 : vector<8x1xf32> to vector<8x32xf32>
    %160 = arith.mulf %150, %159 : vector<8x32xf32>
    %161 = vector.broadcast %9 : vector<1x32xf32> to vector<8x32xf32>
    %162 = arith.mulf %160, %161 : vector<8x32xf32>
    %163 = vector.broadcast %10 : vector<1x32xf32> to vector<8x32xf32>
    %164 = arith.addf %162, %163 : vector<8x32xf32>
    %165 = vector.shape_cast %164 : vector<8x32xf32> to vector<1x8x32xf32>
    %c0_47 = arith.constant 0 : index
    %c0_48 = arith.constant 0 : index
    %c0_49 = arith.constant 0 : index
    %166 = vector.load %arg8[%c0_47, %c0_48, %c0_49] : memref<1x8x32xf32, #tpu.memory_space<vmem>>, vector<1x8x32xf32>
    tpu.vector_store %arg8[%c0_47, %c0_48, %c0_49], %165 {strides = array<i32>} : memref<1x8x32xf32, #tpu.memory_space<vmem>>, vector<1x8x32xf32>,
    return
  }
  func.func @transform_0(%arg0: i32, %arg1: memref<2xi32, #tpu.memory_space<smem>>) -> (i32, i32, i32) {
    %c0_i32 = arith.constant 0 : i32
    %c0_i32_0 = arith.constant 0 : i32
    %c0_i32_1 = arith.constant 0 : i32
    return %arg0, %c0_i32, %c0_i32_0 : i32, i32, i32
  }
  func.func @transform_1(%arg0: i32, %arg1: memref<2xi32, #tpu.memory_space<smem>>) -> (i32, i32) {
    %c0_i32 = arith.constant 0 : i32
    %c0_i32_0 = arith.constant 0 : i32
    %c0_i32_1 = arith.constant 0 : i32
    return %c0_i32, %c0_i32_0 : i32, i32
  }
  func.func @transform_2(%arg0: i32, %arg1: memref<2xi32, #tpu.memory_space<smem>>) -> (i32, i32) {
    %c0_i32 = arith.constant 0 : i32
    %c0_i32_0 = arith.constant 0 : i32
    %c0_i32_1 = arith.constant 0 : i32
    return %c0_i32, %c0_i32_0 : i32, i32
  }
  func.func @transform_3(%arg0: i32, %arg1: memref<2xi32, #tpu.memory_space<smem>>) -> (i32, i32) {
    %c0_i32 = arith.constant 0 : i32
    %c0_i32_0 = arith.constant 0 : i32
    %c0_i32_1 = arith.constant 0 : i32
    return %c0_i32, %c0_i32_0 : i32, i32
  }
  func.func @transform_4(%arg0: i32, %arg1: memref<2xi32, #tpu.memory_space<smem>>) -> (i32, i32) {
    %c0_i32 = arith.constant 0 : i32
    %c0_i32_0 = arith.constant 0 : i32
    %c0_i32_1 = arith.constant 0 : i32
    return %c0_i32, %c0_i32_0 : i32, i32
  }
  func.func @transform_5(%arg0: i32, %arg1: memref<2xi32, #tpu.memory_space<smem>>) -> (i32, i32) {
    %c0_i32 = arith.constant 0 : i32
    %c0_i32_0 = arith.constant 0 : i32
    %c0_i32_1 = arith.constant 0 : i32
    return %c0_i32, %c0_i32_0 : i32, i32
  }
  func.func @transform_6(%arg0: i32, %arg1: memref<2xi32, #tpu.memory_space<smem>>) -> (i32, i32, i32) {
    %c0_i32 = arith.constant 0 : i32
    %c0_i32_0 = arith.constant 0 : i32
    %c0_i32_1 = arith.constant 0 : i32
    return %arg0, %c0_i32, %c0_i32_0 : i32, i32, i32
  }
}

</mosaic_0001>

<llo_original>
// kernel: tpu_custom_call.1
$region0: #{tpu_custom_call.1}
  #allocation0 [shape = 'u32[]', space=smem, size = 0x4, offset = 0x4, fixed_abs, tag = 'smem constant byte address 0x4 - core index']
  #allocation1 [shape = 'u32[72,128]{1,0:T(1,128)}', space=vmem, size = 0x9000, scoped, tag = 'internal scratch']
  #allocation2 [shape = 's32[1]{0}', space=sflag, size = 0x4, scoped, tag = 'scoped memory for tpu_custom_call.1']
  #allocation3 [shape = 'u8[512]{0}', space=smem, size = 0x200, scoped, tag = 'prefetched SMEM operand 0']
  %s0 = inlined_call_operand.hbm [shape: s32[2], index: 0, kind: input, shape index: {}]
  %s1 = inlined_call_operand.hbm [shape: f32[2,8,32], index: 1, kind: input, shape index: {}]
  %s2 = inlined_call_operand.hbm [shape: f32[32,256], index: 2, kind: input, shape index: {}]
  %s3 = inlined_call_operand.vmem [shape: f32[1,128], index: 3, kind: input, shape index: {}]
  %s4 = inlined_call_operand.hbm [shape: f32[32,32], index: 4, kind: input, shape index: {}]
  %s5 = inlined_call_operand.hbm [shape: f32[32,32], index: 5, kind: input, shape index: {}]
  %s6 = inlined_call_operand.hbm [shape: f32[8,32], index: 6, kind: input, shape index: {}]
  %s7 = inlined_call_operand.hbm [shape: f32[2,8,32], index: 7, kind: output, shape index: {}]
  %s8 = sld [smem:[#allocation0]]
  $region77: #{tpu_custom_call.1} parent=0
    _
  %s10 = ssub.s32 1, %s8
  %s11 = scalar_select 0, %s10, %s8
  %s13 = sshll.u32 %s0, 4
  %s14 = int_to_ptr.hbm [resolvable:$true] %s13
  %16 = dma.hbm_to_smem %s14, 16, [#allocation3], [#allocation2]
  %18 = dma.done [#allocation2], 16
  %19 = sfence
  $region1: #{tpu_custom_call.1} parent=0
    #allocation4 [shape = 'u8[8192]{0}', space=vmem, size = 0x2000, scoped, tag = 'input window, operand 1']
    #allocation5 [shape = 's32[2]{0}', space=sflag, size = 0x8, scoped, tag = 'scoped memory for tpu_custom_call.1']
    #allocation6 [shape = 's32[2]{0}', space=sflag, size = 0x8, scoped, tag = 'scoped memory for tpu_custom_call.1']
    #allocation7 [shape = 'u8[32768]{0}', space=vmem, size = 0x8000, scoped, tag = 'input window, operand 2, single buffered']
    #allocation8 [shape = 's32[1]{0}', space=sflag, size = 0x4, scoped, tag = 'scoped memory for tpu_custom_call.1']
    #allocation9 [shape = 'u8[16384]{0}', space=vmem, size = 0x4000, scoped, tag = 'input window, operand 4, single buffered']
    #allocation10 [shape = 'u8[16384]{0}', space=vmem, size = 0x4000, scoped, tag = 'input window, operand 5, single buffered']
    #allocation11 [shape = 's32[1]{0}', space=sflag, size = 0x4, scoped, tag = 'scoped memory for tpu_custom_call.1']
    #allocation12 [shape = 'u8[4096]{0}', space=vmem, size = 0x1000, scoped, tag = 'input window, operand 6, single buffered']
    #allocation13 [shape = 'u8[8192]{0}', space=vmem, size = 0x2000, scoped, tag = 'output window, operand 0']
    %20 = vsyncpa [#allocation5], 0
    %s21 = scalar_lea.sflag [#allocation5], 1
    %22 = vsyncpa %s21, 0
    %23 = vsyncpa [#allocation8], 0
    %24 = vsyncpa [#allocation11], 0
    %25 = vsyncpa [#allocation6], 0
    %s26 = scalar_lea.sflag [#allocation6], 1
    %27 = vsyncpa %s26, 0
    loop: start=0, step=1, limit=4
    $region2: #{tpu_custom_call.1} parent=1 // loop_pre_header
      _
    $region3: #{tpu_custom_call.1} parent=1 // loop_header
      %s29 = sphi 0, %s33
      %p30 = scmp.ge.s32.totalorder %s29, 4
      %s39 = sphi 0, %s41
      %s42 = sphi 0, %s39
      %s43 = sphi 0, %s42
      %s59 = sphi 0, %s43
      %s63 = sphi 0, %s63
      %s65 = sphi 0, %s63
      %s66 = sphi 0, %s65
      %s80 = sphi 0, %s66
      %s84 = sphi 0, %s84
      %s86 = sphi 0, %s84
      %s87 = sphi 0, %s86
      %s101 = sphi 0, %s87
      %s105 = sphi 0, %s105
      %s107 = sphi 0, %s105
      %s108 = sphi 0, %s107
      %s122 = sphi 0, %s108
      %s126 = sphi 0, %s126
      %s128 = sphi 0, %s126
      %s129 = sphi 0, %s128
      %s143 = sphi 0, %s129
      %s147 = sphi 0, %s147
      %s149 = sphi 0, %s147
      %s150 = sphi 0, %s149
      %s164 = sphi 0, %s150
      %s170 = sphi 0, %s172
      %s173 = sphi 0, %s170
      %s174 = sphi 0, %s173
      %s190 = sphi 0, %s174
    $region4: #{tpu_custom_call.1} parent=1 // loop_header_branch
      %32 = sbr.rel (%p30) target = $region8
    $region5: #{tpu_custom_call.1} parent=1 // loop_body
      %s34 = ssub.s32 %s29, 1
      %s35 = ssub.s32 %s29, 2
      %s36 = sadd.s32 %s29, 1
      %s37 = ssub.s32 %s29, %s36
      %p38 = scmp.eq.s32.totalorder %s37, 0
      %s40 = sadd.s32 %s39, 1
      %s41 = scalar_select %p38, %s39, %s40
      %p44 = pneg %p38
      %p45 = scmp.eq.s32.totalorder %s29, 1
      %p46 = por %p44, %p45
      %p47 = scmp.ne.s32.totalorder %s39, %s42
      %p48 = scmp.eq.s32.totalorder %s29, 0
      %p49 = por %p47, %p48
      %p50 = scmp.ne.s32.totalorder %s39, %s42
      %p51 = scmp.eq.s32.totalorder %s34, 1
      %p52 = por %p50, %p51
      %p53 = scmp.ne.s32.totalorder %s42, %s43
      %p54 = scmp.eq.s32.totalorder %s34, 0
      %p55 = por %p53, %p54
      %p56 = scmp.ne.s32.totalorder %s42, %s43
      %p57 = scmp.eq.s32.totalorder %s35, 1
      %p58 = por %p56, %p57
      %p60 = scmp.ne.s32.totalorder %s43, %s59
      %p61 = scmp.eq.s32.totalorder %s35, 0
      %p62 = por %p60, %p61
      %s64 = sadd.s32 %s63, 1
      %p67 = scmp.eq.s32.totalorder %s29, 1
      %p68 = scmp.ne.s32.totalorder %s63, %s65
      %p69 = scmp.eq.s32.totalorder %s29, 0
      %p70 = por %p68, %p69
      %p71 = scmp.ne.s32.totalorder %s63, %s65
      %p72 = scmp.eq.s32.totalorder %s34, 1
      %p73 = por %p71, %p72
      %p74 = scmp.ne.s32.totalorder %s65, %s66
      %p75 = scmp.eq.s32.totalorder %s34, 0
      %p76 = por %p74, %p75
      %p77 = scmp.ne.s32.totalorder %s65, %s66
      %p78 = scmp.eq.s32.totalorder %s35, 1
      %p79 = por %p77, %p78
      %p81 = scmp.ne.s32.totalorder %s66, %s80
      %p82 = scmp.eq.s32.totalorder %s35, 0
      %p83 = por %p81, %p82
      %s85 = sadd.s32 %s84, 1
      %p88 = scmp.eq.s32.totalorder %s29, 1
      %p89 = scmp.ne.s32.totalorder %s84, %s86
      %p90 = scmp.eq.s32.totalorder %s29, 0
      %p91 = por %p89, %p90
      %p92 = scmp.ne.s32.totalorder %s84, %s86
      %p93 = scmp.eq.s32.totalorder %s34, 1
      %p94 = por %p92, %p93
      %p95 = scmp.ne.s32.totalorder %s86, %s87
      %p96 = scmp.eq.s32.totalorder %s34, 0
      %p97 = por %p95, %p96
      %p98 = scmp.ne.s32.totalorder %s86, %s87
      %p99 = scmp.eq.s32.totalorder %s35, 1
      %p100 = por %p98, %p99
      %p102 = scmp.ne.s32.totalorder %s87, %s101
      %p103 = scmp.eq.s32.totalorder %s35, 0
      %p104 = por %p102, %p103
      %s106 = sadd.s32 %s105, 1
      %p109 = scmp.eq.s32.totalorder %s29, 1
      %p110 = scmp.ne.s32.totalorder %s105, %s107
      %p111 = scmp.eq.s32.totalorder %s29, 0
      %p112 = por %p110, %p111
      %p113 = scmp.ne.s32.totalorder %s105, %s107
      %p114 = scmp.eq.s32.totalorder %s34, 1
      %p115 = por %p113, %p114
      %p116 = scmp.ne.s32.totalorder %s107, %s108
      %p117 = scmp.eq.s32.totalorder %s34, 0
      %p118 = por %p116, %p117
      %p119 = scmp.ne.s32.totalorder %s107, %s108
      %p120 = scmp.eq.s32.totalorder %s35, 1
      %p121 = por %p119, %p120
      %p123 = scmp.ne.s32.totalorder %s108, %s122
      %p124 = scmp.eq.s32.totalorder %s35, 0
      %p125 = por %p123, %p124
      %s127 = sadd.s32 %s126, 1
      %p130 = scmp.eq.s32.totalorder %s29, 1
      %p131 = scmp.ne.s32.totalorder %s126, %s128
      %p132 = scmp.eq.s32.totalorder %s29, 0
      %p133 = por %p131, %p132
      %p134 = scmp.ne.s32.totalorder %s126, %s128
      %p135 = scmp.eq.s32.totalorder %s34, 1
      %p136 = por %p134, %p135
      %p137 = scmp.ne.s32.totalorder %s128, %s129
      %p138 = scmp.eq.s32.totalorder %s34, 0
      %p139 = por %p137, %p138
      %p140 = scmp.ne.s32.totalorder %s128, %s129
      %p141 = scmp.eq.s32.totalorder %s35, 1
      %p142 = por %p140, %p141
      %p144 = scmp.ne.s32.totalorder %s129, %s143
      %p145 = scmp.eq.s32.totalorder %s35, 0
      %p146 = por %p144, %p145
      %s148 = sadd.s32 %s147, 1
      %p151 = scmp.eq.s32.totalorder %s29, 1
      %p152 = scmp.ne.s32.totalorder %s147, %s149
      %p153 = scmp.eq.s32.totalorder %s29, 0
      %p154 = por %p152, %p153
      %p155 = scmp.ne.s32.totalorder %s147, %s149
      %p156 = scmp.eq.s32.totalorder %s34, 1
      %p157 = por %p155, %p156
      %p158 = scmp.ne.s32.totalorder %s149, %s150
      %p159 = scmp.eq.s32.totalorder %s34, 0
      %p160 = por %p158, %p159
      %p161 = scmp.ne.s32.totalorder %s149, %s150
      %p162 = scmp.eq.s32.totalorder %s35, 1
      %p163 = por %p161, %p162
      %p165 = scmp.ne.s32.totalorder %s150, %s164
      %p166 = scmp.eq.s32.totalorder %s35, 0
      %p167 = por %p165, %p166
      %s168 = ssub.s32 %s29, %s36
      %p169 = scmp.eq.s32.totalorder %s168, 0
      %s171 = sadd.s32 %s170, 1
      %s172 = scalar_select %p169, %s170, %s171
      %p175 = pneg %p169
      %p176 = scmp.eq.s32.totalorder %s29, 1
      %p177 = por %p175, %p176
      %p178 = scmp.ne.s32.totalorder %s170, %s173
      %p179 = scmp.eq.s32.totalorder %s29, 0
      %p180 = por %p178, %p179
      %p181 = scmp.ne.s32.totalorder %s170, %s173
      %p182 = scmp.eq.s32.totalorder %s34, 1
      %p183 = por %p181, %p182
      %p184 = scmp.ne.s32.totalorder %s173, %s174
      %p185 = scmp.eq.s32.totalorder %s34, 0
      %p186 = por %p184, %p185
      %p187 = scmp.ne.s32.totalorder %s173, %s174
      %p188 = scmp.eq.s32.totalorder %s35, 1
      %p189 = por %p187, %p188
      %p191 = scmp.ne.s32.totalorder %s174, %s190
      %p192 = scmp.eq.s32.totalorder %s35, 0
      %p193 = por %p191, %p192
      %p194 = scmp.le.s32.totalorder 1, %s29
      %p195 = scmp.lt.s32.totalorder %s29, 3
      %p196 = pnand %p194, %p195
      %p197 = pneg %p196
      // Predicated region
      $region9: #{tpu_custom_call.1} parent=5 // pred_check
        _
      $region10: #{tpu_custom_call.1} parent=5 // pred_check_branch
        %199 = sbr.rel (%p196) target = $region12
      $region11: #{tpu_custom_call.1} parent=5 // pred_region
        %s200 = ssub.s32 %s29, 1
        // Predicated region
        $region13: #{tpu_custom_call.1} parent=11 // pred_check
          %p201 = pneg %p76
        $region14: #{tpu_custom_call.1} parent=11 // pred_check_branch
          %203 = sbr.rel (%p201) target = $region16
        $region15: #{tpu_custom_call.1} parent=11 // pred_region
          %205 = vsyncadd [#allocation8], 0
          %s206 = sshll.u32 %s2, 4
          %s207 = int_to_ptr.hbm [resolvable:$true] %s206
          %s208 = sshll.u32 [#allocation7], 4
          %s209 = int_to_ptr.vmem [resolvable:$true] %s208
          %214 = dma.hbm_to_vmem [thread:$0]  %s207, 1024, %s209, [#allocation8], 256, 256, 16
        $region16: #{tpu_custom_call.1} parent=11 // pred_fallthru
          _
        // Predicated region
        $region17: #{tpu_custom_call.1} parent=11 // pred_check
          %p215 = pneg %p97
        $region18: #{tpu_custom_call.1} parent=11 // pred_check_branch
          %217 = sbr.rel (%p215) target = $region20
        $region19: #{tpu_custom_call.1} parent=11 // pred_region
          _
        $region20: #{tpu_custom_call.1} parent=11 // pred_fallthru
          _
        // Predicated region
        $region21: #{tpu_custom_call.1} parent=11 // pred_check
          %p218 = pneg %p118
        $region22: #{tpu_custom_call.1} parent=11 // pred_check_branch
          %220 = sbr.rel (%p218) target = $region24
        $region23: #{tpu_custom_call.1} parent=11 // pred_region
          %222 = vsyncadd [#allocation8], 0
          %s223 = sshll.u32 %s4, 4
          %s224 = int_to_ptr.hbm [resolvable:$true] %s223
          %s225 = sshll.u32 [#allocation9], 4
          %s226 = int_to_ptr.vmem [resolvable:$true] %s225
          %231 = dma.hbm_to_vmem [thread:$0]  %s224, 512, %s226, [#allocation8], 128, 128, 8
        $region24: #{tpu_custom_call.1} parent=11 // pred_fallthru
          _
        // Predicated region
        $region25: #{tpu_custom_call.1} parent=11 // pred_check
          %p232 = pneg %p139
        $region26: #{tpu_custom_call.1} parent=11 // pred_check_branch
          %234 = sbr.rel (%p232) target = $region28
        $region27: #{tpu_custom_call.1} parent=11 // pred_region
          %236 = vsyncadd [#allocation11], 0
          %s237 = sshll.u32 %s5, 4
          %s238 = int_to_ptr.hbm [resolvable:$true] %s237
          %s239 = sshll.u32 [#allocation10], 4
          %s240 = int_to_ptr.vmem [resolvable:$true] %s239
          %245 = dma.hbm_to_vmem [thread:$0]  %s238, 512, %s240, [#allocation11], 128, 128, 8
        $region28: #{tpu_custom_call.1} parent=11 // pred_fallthru
          _
        // Predicated region
        $region29: #{tpu_custom_call.1} parent=11 // pred_check
          %p246 = pneg %p160
        $region30: #{tpu_custom_call.1} parent=11 // pred_check_branch
          %248 = sbr.rel (%p246) target = $region32
        $region31: #{tpu_custom_call.1} parent=11 // pred_region
          %250 = vsyncadd [#allocation11], 0
          %s252 = sshll.u32 %s6, 4
          %s253 = int_to_ptr.hbm [resolvable:$true] %s252
          %s254 = sshll.u32 [#allocation12], 4
          %s255 = int_to_ptr.vmem [resolvable:$true] %s254
          %257 = dma.hbm_to_vmem [thread:$0]  %s253, 128, %s255, [#allocation11]
        $region32: #{tpu_custom_call.1} parent=11 // pred_fallthru
          _
      $region12: #{tpu_custom_call.1} parent=5 // pred_fallthru
        _
      %p258 = scmp.lt.s32.totalorder %s29, 2
      // Predicated region
      $region33: #{tpu_custom_call.1} parent=5 // pred_check
        %p259 = pneg %p258
      $region34: #{tpu_custom_call.1} parent=5 // pred_check_branch
        %261 = sbr.rel (%p259) target = $region36
      $region35: #{tpu_custom_call.1} parent=5 // pred_region
        // Predicated region
        $region37: #{tpu_custom_call.1} parent=35 // pred_check
          %p262 = pneg %p49
        $region38: #{tpu_custom_call.1} parent=35 // pred_check_branch
          %264 = sbr.rel (%p262) target = $region40
        $region39: #{tpu_custom_call.1} parent=35 // pred_region
          %s265 = sand.u32 %s39, 1
          %s266 = scalar_lea.sflag [#allocation5], %s265
          %s267 = sand.u32 %s39, 1
          %s268 = smul.addr %s267, 8
          %s269 = scalar_lea.vmem [#allocation4], %s268
          %271 = vsyncadd %s266, 0
          %s272 = smul.addr %s29, 8
          %s273 = scalar_lea.hbm %s1, %s272
          %s275 = sshll.u32 %s273, 4
          %s276 = int_to_ptr.hbm [resolvable:$true] %s275
          %s277 = sshll.u32 %s269, 4
          %s278 = int_to_ptr.vmem [resolvable:$true] %s277
          %280 = dma.hbm_to_vmem [thread:$0]  %s276, 128, %s278, %s266
        $region40: #{tpu_custom_call.1} parent=35 // pred_fallthru
          _
      $region36: #{tpu_custom_call.1} parent=5 // pred_fallthru
        _
      %p281 = scmp.le.s32.totalorder 1, %s29
      %p282 = scmp.lt.s32.totalorder %s29, 3
      %p283 = pnand %p281, %p282
      %p284 = pneg %p283
      // Predicated region
      $region41: #{tpu_custom_call.1} parent=5 // pred_check
        _
      $region42: #{tpu_custom_call.1} parent=5 // pred_check_branch
        %286 = sbr.rel (%p283) target = $region44
      $region43: #{tpu_custom_call.1} parent=5 // pred_region
        %s287 = ssub.s32 %s29, 1
        %s288 = sand.u32 %s42, 1
        %s289 = scalar_lea.sflag [#allocation5], %s288
        %s290 = sand.u32 %s42, 1
        %s291 = smul.addr %s290, 8
        %s292 = scalar_lea.vmem [#allocation4], %s291
        // Predicated region
        $region45: #{tpu_custom_call.1} parent=43 // pred_check
          %p293 = pneg %p55
        $region46: #{tpu_custom_call.1} parent=43 // pred_check_branch
          %295 = sbr.rel (%p293) target = $region48
        $region47: #{tpu_custom_call.1} parent=43 // pred_region
          %297 = dma.done %s289, 128
        $region48: #{tpu_custom_call.1} parent=43 // pred_fallthru
          _
        // Predicated region
        $region49: #{tpu_custom_call.1} parent=43 // pred_check
          %p298 = pneg %p76
        $region50: #{tpu_custom_call.1} parent=43 // pred_check_branch
          %300 = sbr.rel (%p298) target = $region52
        $region51: #{tpu_custom_call.1} parent=43 // pred_region
          %302 = dma.done [#allocation8], 1024
        $region52: #{tpu_custom_call.1} parent=43 // pred_fallthru
          _
        // Predicated region
        $region53: #{tpu_custom_call.1} parent=43 // pred_check
          %p303 = pneg %p118
        $region54: #{tpu_custom_call.1} parent=43 // pred_check_branch
          %305 = sbr.rel (%p303) target = $region56
        $region55: #{tpu_custom_call.1} parent=43 // pred_region
          %307 = dma.done [#allocation8], 512
        $region56: #{tpu_custom_call.1} parent=43 // pred_fallthru
          _
        // Predicated region
        $region57: #{tpu_custom_call.1} parent=43 // pred_check
          %p308 = pneg %p139
        $region58: #{tpu_custom_call.1} parent=43 // pred_check_branch
          %310 = sbr.rel (%p308) target = $region60
        $region59: #{tpu_custom_call.1} parent=43 // pred_region
          %312 = dma.done [#allocation11], 512
        $region60: #{tpu_custom_call.1} parent=43 // pred_fallthru
          _
        // Predicated region
        $region61: #{tpu_custom_call.1} parent=43 // pred_check
          %p313 = pneg %p160
        $region62: #{tpu_custom_call.1} parent=43 // pred_check_branch
          %315 = sbr.rel (%p313) target = $region64
        $region63: #{tpu_custom_call.1} parent=43 // pred_region
          %317 = dma.done [#allocation11], 128
        $region64: #{tpu_custom_call.1} parent=43 // pred_fallthru
          _
        %s318 = sand.u32 %s42, 1
        %s319 = scalar_lea.sflag [#allocation5], %s318
        %s320 = sand.u32 %s42, 1
        %s321 = smul.addr %s320, 8
        %s322 = scalar_lea.vmem [#allocation4], %s321
        %p323 = pneg %p55
        %p324 = pneg %p52
        %p325 = pneg %p76
        %p326 = pneg %p73
        %p327 = pneg %p97
        %p328 = pneg %p94
        %p329 = pneg %p118
        %p330 = pneg %p115
        %p331 = pneg %p139
        %p332 = pneg %p136
        %p333 = pneg %p160
        %p334 = pneg %p157
        %p335 = pneg %p186
        %p336 = pneg %p183
        %s337 = sand.u32 %s173, 1
        %s338 = scalar_lea.sflag [#allocation6], %s337
        %s339 = sand.u32 %s173, 1
        %s340 = smul.addr %s339, 8
        %s341 = scalar_lea.vmem [#allocation13], %s340
        %v342 = vld [vmem:[%s292] sm:$0xff]
        %v343 = vld [vmem:[#allocation12] sm:$0xff]
        %v344 = vld [vmem:[#allocation7] sm:$0xff]
        %v345 = vld [vmem:[#allocation7 + $0x8] sm:$0xff]
        %v346 = vld [vmem:[#allocation7 + $0x10] sm:$0xff]
        %v347 = vld [vmem:[#allocation7 + $0x18] sm:$0xff]
        %v348 = vld [vmem:[#allocation7 + $0x20] sm:$0xff]
        %v349 = vld [vmem:[#allocation7 + $0x28] sm:$0xff]
        %v350 = vld [vmem:[#allocation7 + $0x30] sm:$0xff]
        %v351 = vld [vmem:[#allocation7 + $0x38] sm:$0xff]
        %vm352 = vcmask 261120
        %v354 = vsel %vm352, %v342, 0
        %356 = vmatpush.msra.mxu0 0.0
        %357 = vmatpush.msra.mxu0 0.0
        %358 = vmatpush.msra.mxu0 0.0
        %359 = vmatpush.msra.mxu0 0.0
        %360 = vmatpush.msra.mxu0 0.0
        %361 = vmatpush.msra.mxu0 0.0
        %362 = vmatpush.msra.mxu0 0.0
        %363 = vmatpush.msra.mxu0 0.0
        %364 = vmatpush.msra.mxu0 0.0
        %365 = vmatpush.msra.mxu0 0.0
        %366 = vmatpush.msra.mxu0 0.0
        %367 = vmatpush.msra.mxu0 0.0
        %368 = vmatpush.msra.mxu0 %v350
        %369 = vmatpush.msra.mxu0 %v348
        %370 = vmatpush.msra.mxu0 %v346
        %371 = vmatpush.msra.mxu0 %v344
        %372 = vmatmul.f32.gmra.mxu0 %v354
        %v373 = vpop.f32.mrf.mxu0
        %v374 = vadd.f32 0.0, %v373
        %375 = vdwg.mxu0
        %376 = vmatpush.msra.mxu0 0.0
        %377 = vmatpush.msra.mxu0 0.0
        %378 = vmatpush.msra.mxu0 0.0
        %379 = vmatpush.msra.mxu0 0.0
        %380 = vmatpush.msra.mxu0 0.0
        %381 = vmatpush.msra.mxu0 0.0
        %382 = vmatpush.msra.mxu0 0.0
        %383 = vmatpush.msra.mxu0 0.0
        %384 = vmatpush.msra.mxu0 0.0
        %385 = vmatpush.msra.mxu0 0.0
        %386 = vmatpush.msra.mxu0 0.0
        %387 = vmatpush.msra.mxu0 0.0
        %388 = vmatpush.msra.mxu0 %v351
        %389 = vmatpush.msra.mxu0 %v349
        %390 = vmatpush.msra.mxu0 %v347
        %391 = vmatpush.msra.mxu0 %v345
        %392 = vmatmul.f32.gmra.mxu0 %v354
        %v393 = vpop.f32.mrf.mxu0
        %v394 = vadd.f32 0.0, %v393
        %395 = vdwg.mxu0
        %v396 = vld [vmem:[%s3] sm:$0x1]
        %v398 = vperm.slane %v396, 0
        %v400 = vadd.f32 %v394, %v398
        %v401 = vlaneseq
        %v402 = vand.u32 %v401, 127
        %s403 = sld [smem:[#allocation3 + %s34]]
        %v404 = vstv %s403
        %vm405 = vcmp.lt.s32.totalorder %v402, %v404
        %v407 = vsel %vm352, %v374, 0
        %409 = vmatpush.xpose.msra.mxu0 0.0
        %410 = vmatpush.xpose.msra.mxu0 0.0
        %411 = vmatpush.xpose.msra.mxu0 0.0
        %412 = vmatpush.xpose.msra.mxu0 0.0
        %413 = vmatpush.xpose.msra.mxu0 0.0
        %414 = vmatpush.xpose.msra.mxu0 0.0
        %415 = vmatpush.xpose.msra.mxu0 0.0
        %416 = vmatpush.xpose.msra.mxu0 0.0
        %417 = vmatpush.xpose.msra.mxu0 0.0
        %418 = vmatpush.xpose.msra.mxu0 0.0
        %419 = vmatpush.xpose.msra.mxu0 0.0
        %420 = vmatpush.xpose.msra.mxu0 0.0
        %421 = vmatpush.xpose.msra.mxu0 0.0
        %422 = vmatpush.xpose.msra.mxu0 0.0
        %423 = vmatpush.xpose.msra.mxu0 0.0
        %424 = vmatpush.xpose.msra.mxu0 %v354
        %425 = vmatmul.f32.gmra.mxu0 %v407
        %v426 = vpop.f32.mrf.mxu0
        %v427 = vadd.f32 0.0, %v426
        %428 = vdwg.mxu0
        %v429 = vsel %vm405, 1, 0
        %vm430 = vcmp.eq.s32.totalorder %v429, 1
        %v431 = vsel %vm430, %v427, -10000.0
        %vm432 = vcmask 64512
        %v433 = vsel %vm432, %v431, -inf
        %434 = vmax.xlane.f32.xlu0 %v433
        %v435 = vpop.xlane.xlu0 %434
        %v436 = vsub.f32 %v431, %v435
        %v437 = vmul.f32 %v436, 1.442695
        %v438 = vpow.pop %v437
        %v439 = vsel %vm432, %v438, 0.0
        %440 = vadd.xlane.f32.xlu0 %v439
        %v441 = vpop.xlane.xlu0 %440
        %v442 = vrcp.pop %v441
        %v443 = vmul.f32 %v438, %v442
        %444 = vrot.lane.b32.xlu0 %v374, 96
        %v445 = vpop.permute.xlu0 %444
        %v446 = vsel %vm352, %v445, 0
        %448 = vmatpush.xpose.msra.mxu0 0.0
        %449 = vmatpush.xpose.msra.mxu0 0.0
        %450 = vmatpush.xpose.msra.mxu0 0.0
        %451 = vmatpush.xpose.msra.mxu0 0.0
        %452 = vmatpush.xpose.msra.mxu0 0.0
        %453 = vmatpush.xpose.msra.mxu0 0.0
        %454 = vmatpush.xpose.msra.mxu0 0.0
        %455 = vmatpush.xpose.msra.mxu0 0.0
        %456 = vmatpush.xpose.msra.mxu0 0.0
        %457 = vmatpush.xpose.msra.mxu0 0.0
        %458 = vmatpush.xpose.msra.mxu0 0.0
        %459 = vmatpush.xpose.msra.mxu0 0.0
        %460 = vmatpush.xpose.msra.mxu0 0.0
        %461 = vmatpush.xpose.msra.mxu0 0.0
        %462 = vmatpush.xpose.msra.mxu0 0.0
        %463 = vmatpush.xpose.msra.mxu0 %v354
        %464 = vmatmul.f32.gmra.mxu0 %v446
        %v465 = vpop.f32.mrf.mxu0
        %v466 = vadd.f32 0.0, %v465
        %467 = vdwg.mxu0
        %v468 = vsel %vm430, %v466, -10000.0
        %v469 = vsel %vm432, %v468, -inf
        %470 = vmax.xlane.f32.xlu0 %v469
        %v471 = vpop.xlane.xlu0 %470
        %v472 = vsub.f32 %v468, %v471
        %v473 = vmul.f32 %v472, 1.442695
        %v474 = vpow.pop %v473
        %v475 = vsel %vm432, %v474, 0.0
        %476 = vadd.xlane.f32.xlu0 %v475
        %v477 = vpop.xlane.xlu0 %476
        %v478 = vrcp.pop %v477
        %v479 = vmul.f32 %v474, %v478
        %481 = vrot.lane.b32.xlu0 %v400, 96
        %v482 = vpop.permute.xlu0 %481
        %v485 = vsel %vm432, %v479, 0
        %487 = vmatpush.msra.mxu0 0.0
        %488 = vmatpush.msra.mxu0 0.0
        %489 = vmatpush.msra.mxu0 0.0
        %490 = vmatpush.msra.mxu0 0.0
        %491 = vmatpush.msra.mxu0 0.0
        %492 = vmatpush.msra.mxu0 0.0
        %493 = vmatpush.msra.mxu0 0.0
        %494 = vmatpush.msra.mxu0 0.0
        %495 = vmatpush.msra.mxu0 0.0
        %496 = vmatpush.msra.mxu0 0.0
        %497 = vmatpush.msra.mxu0 0.0
        %498 = vmatpush.msra.mxu0 0.0
        %499 = vmatpush.msra.mxu0 0.0
        %500 = vmatpush.msra.mxu0 0.0
        %501 = vmatpush.msra.mxu0 0.0
        %502 = vmatpush.msra.mxu0 %v482
        %503 = vmatmul.f32.gmra.mxu0 %v485
        %v504 = vpop.f32.mrf.mxu0
        %v505 = vadd.f32 0.0, %v504
        %506 = vdwg.mxu0
        %507 = vrot.lane.b32.xlu0 %v374, 64
        %v508 = vpop.permute.xlu0 %507
        %v509 = vsel %vm352, %v508, 0
        %511 = vmatpush.xpose.msra.mxu0 0.0
        %512 = vmatpush.xpose.msra.mxu0 0.0
        %513 = vmatpush.xpose.msra.mxu0 0.0
        %514 = vmatpush.xpose.msra.mxu0 0.0
        %515 = vmatpush.xpose.msra.mxu0 0.0
        %516 = vmatpush.xpose.msra.mxu0 0.0
        %517 = vmatpush.xpose.msra.mxu0 0.0
        %518 = vmatpush.xpose.msra.mxu0 0.0
        %519 = vmatpush.xpose.msra.mxu0 0.0
        %520 = vmatpush.xpose.msra.mxu0 0.0
        %521 = vmatpush.xpose.msra.mxu0 0.0
        %522 = vmatpush.xpose.msra.mxu0 0.0
        %523 = vmatpush.xpose.msra.mxu0 0.0
        %524 = vmatpush.xpose.msra.mxu0 0.0
        %525 = vmatpush.xpose.msra.mxu0 0.0
        %526 = vmatpush.xpose.msra.mxu0 %v354
        %527 = vmatmul.f32.gmra.mxu0 %v509
        %v528 = vpop.f32.mrf.mxu0
        %v529 = vadd.f32 0.0, %v528
        %530 = vdwg.mxu0
        %v531 = vsel %vm430, %v529, -10000.0
        %v532 = vsel %vm432, %v531, -inf
        %533 = vmax.xlane.f32.xlu0 %v532
        %v534 = vpop.xlane.xlu0 %533
        %v535 = vsub.f32 %v531, %v534
        %v536 = vmul.f32 %v535, 1.442695
        %v537 = vpow.pop %v536
        %v538 = vsel %vm432, %v537, 0.0
        %539 = vadd.xlane.f32.xlu0 %v538
        %v540 = vpop.xlane.xlu0 %539
        %v541 = vrcp.pop %v540
        %v542 = vmul.f32 %v537, %v541
        %543 = vrot.lane.b32.xlu0 %v374, 32
        %v544 = vpop.permute.xlu0 %543
        %v545 = vsel %vm352, %v544, 0
        %547 = vmatpush.xpose.msra.mxu0 0.0
        %548 = vmatpush.xpose.msra.mxu0 0.0
        %549 = vmatpush.xpose.msra.mxu0 0.0
        %550 = vmatpush.xpose.msra.mxu0 0.0
        %551 = vmatpush.xpose.msra.mxu0 0.0
        %552 = vmatpush.xpose.msra.mxu0 0.0
        %553 = vmatpush.xpose.msra.mxu0 0.0
        %554 = vmatpush.xpose.msra.mxu0 0.0
        %555 = vmatpush.xpose.msra.mxu0 0.0
        %556 = vmatpush.xpose.msra.mxu0 0.0
        %557 = vmatpush.xpose.msra.mxu0 0.0
        %558 = vmatpush.xpose.msra.mxu0 0.0
        %559 = vmatpush.xpose.msra.mxu0 0.0
        %560 = vmatpush.xpose.msra.mxu0 0.0
        %561 = vmatpush.xpose.msra.mxu0 0.0
        %562 = vmatpush.xpose.msra.mxu0 %v354
        %563 = vmatmul.f32.gmra.mxu0 %v545
        %v564 = vpop.f32.mrf.mxu0
        %v565 = vadd.f32 0.0, %v564
        %566 = vdwg.mxu0
        %v567 = vsel %vm430, %v565, -10000.0
        %v568 = vsel %vm432, %v567, -inf
        %569 = vmax.xlane.f32.xlu0 %v568
        %v570 = vpop.xlane.xlu0 %569
        %v571 = vsub.f32 %v567, %v570
        %v572 = vmul.f32 %v571, 1.442695
        %v573 = vpow.pop %v572
        %v574 = vsel %vm432, %v573, 0.0
        %575 = vadd.xlane.f32.xlu0 %v574
        %v576 = vpop.xlane.xlu0 %575
        %v577 = vrcp.pop %v576
        %v578 = vmul.f32 %v573, %v577
        %579 = vrot.lane.b32.xlu0 %v400, 32
        %v580 = vpop.permute.xlu0 %579
        %v583 = vsel %vm432, %v578, 0
        %585 = vmatpush.msra.mxu0 0.0
        %586 = vmatpush.msra.mxu0 0.0
        %587 = vmatpush.msra.mxu0 0.0
        %588 = vmatpush.msra.mxu0 0.0
        %589 = vmatpush.msra.mxu0 0.0
        %590 = vmatpush.msra.mxu0 0.0
        %591 = vmatpush.msra.mxu0 0.0
        %592 = vmatpush.msra.mxu0 0.0
        %593 = vmatpush.msra.mxu0 0.0
        %594 = vmatpush.msra.mxu0 0.0
        %595 = vmatpush.msra.mxu0 0.0
        %596 = vmatpush.msra.mxu0 0.0
        %597 = vmatpush.msra.mxu0 0.0
        %598 = vmatpush.msra.mxu0 0.0
        %599 = vmatpush.msra.mxu0 0.0
        %600 = vmatpush.msra.mxu0 %v580
        %601 = vmatmul.f32.gmra.mxu0 %v583
        %v602 = vpop.f32.mrf.mxu0
        %v603 = vadd.f32 0.0, %v602
        %604 = vdwg.mxu0
        %v606 = vsel %vm432, %v443, 0
        %608 = vmatpush.msra.mxu0 0.0
        %609 = vmatpush.msra.mxu0 0.0
        %610 = vmatpush.msra.mxu0 0.0
        %611 = vmatpush.msra.mxu0 0.0
        %612 = vmatpush.msra.mxu0 0.0
        %613 = vmatpush.msra.mxu0 0.0
        %614 = vmatpush.msra.mxu0 0.0
        %615 = vmatpush.msra.mxu0 0.0
        %616 = vmatpush.msra.mxu0 0.0
        %617 = vmatpush.msra.mxu0 0.0
        %618 = vmatpush.msra.mxu0 0.0
        %619 = vmatpush.msra.mxu0 0.0
        %620 = vmatpush.msra.mxu0 0.0
        %621 = vmatpush.msra.mxu0 0.0
        %622 = vmatpush.msra.mxu0 0.0
        %623 = vmatpush.msra.mxu0 %v400
        %624 = vmatmul.f32.gmra.mxu0 %v606
        %v625 = vpop.f32.mrf.mxu0
        %v626 = vadd.f32 %v505, %v625
        %627 = vdwg.mxu0
        %628 = vrot.lane.b32.xlu0 %v400, 64
        %v629 = vpop.permute.xlu0 %628
        %v632 = vsel %vm432, %v542, 0
        %634 = vmatpush.msra.mxu0 0.0
        %635 = vmatpush.msra.mxu0 0.0
        %636 = vmatpush.msra.mxu0 0.0
        %637 = vmatpush.msra.mxu0 0.0
        %638 = vmatpush.msra.mxu0 0.0
        %639 = vmatpush.msra.mxu0 0.0
        %640 = vmatpush.msra.mxu0 0.0
        %641 = vmatpush.msra.mxu0 0.0
        %642 = vmatpush.msra.mxu0 0.0
        %643 = vmatpush.msra.mxu0 0.0
        %644 = vmatpush.msra.mxu0 0.0
        %645 = vmatpush.msra.mxu0 0.0
        %646 = vmatpush.msra.mxu0 0.0
        %647 = vmatpush.msra.mxu0 0.0
        %648 = vmatpush.msra.mxu0 0.0
        %649 = vmatpush.msra.mxu0 %v629
        %650 = vmatmul.f32.gmra.mxu0 %v632
        %v651 = vpop.f32.mrf.mxu0
        %v652 = vadd.f32 %v603, %v651
        %653 = vdwg.mxu0
        %v654 = vadd.f32 %v626, %v652
        %v655 = vperm.slane %v343, 0
        %v656 = vadd.f32 %v654, %v655
        %v657 = vxor.u32 %v343, 2147483648
        %v658 = vmul.f32 %v657, 1.442695
        %v659 = vpow.pop %v658
        %v660 = vadd.f32 %v659, 1.0
        %v661 = vrcp.pop %v660
        %v662 = vmul.f32 %v660, %v661
        %v663 = vsub.f32 1.0, %v662
        %v664 = vmul.f32 %v661, %v663
        %v665 = vadd.f32 %v661, %v664
        %vm666 = vweird.f32 %v660
        %vm667 = vweird.f32 %v661
        %vm668 = vmor %vm666, %vm667
        %v669 = vsel %vm668, %v661, %v665
        %v670 = vand.u32 2147483647, %v660
        %vm671 = vcmp.eq.f32.partialorder %v670, 8.507059e+37
        %v672 = vand.u32 %v660, 2147483648
        %v673 = vor.u32 1.1754944e-38, %v672
        %v674 = vsel %vm671, %v673, %v669
        %v675 = vmul.f32 1.0, %v674
        %v676 = vperm.slane %v675, 1
        %v677 = vmul.f32 %v676, %v656
        %v678 = vsub.f32 1.0, %v675
        %v679 = vperm.slane %v678, 1
        %v680 = vmul.f32 %v679, %v342
        %v681 = vadd.f32 %v677, %v680
        %v682 = vsel %vm352, %v681, 0.0
        %683 = vadd.xlane.f32.xlu0 %v682
        %v684 = vpop.xlane.xlu0 %683
        %v685 = vrcp.pop 32.0
        %v686 = vmul.f32 32.0, %v685
        %v687 = vsub.f32 1.0, %v686
        %v688 = vmul.f32 %v685, %v687
        %v689 = vadd.f32 %v685, %v688
        %vm690 = vweird.f32 %v685
        %v691 = vsel %vm690, %v685, %v689
        %v692 = vmul.f32 %v684, %v691
        %v693 = vsub.f32 %v681, %v692
        %v694 = vmul.f32 %v693, %v693
        %v695 = vsel %vm352, %v694, 0.0
        %696 = vadd.xlane.f32.xlu0 %v695
        %v697 = vpop.xlane.xlu0 %696
        %v698 = vmul.f32 %v697, %v691
        %v699 = vadd.f32 %v698, 1e-05
        %v700 = vrsqrt.pop %v699
        %v701 = vmul.f32 %v700, %v699
        %v702 = vmul.f32 %v701, %v700
        %v703 = vmul.f32 0.5, %v702
        %v704 = vsub.f32 1.5, %v703
        %v705 = vmul.f32 %v700, %v704
        %vm706 = vweird.f32 %v699
        %vm707 = vweird.f32 %v700
        %vm708 = vmor %vm706, %vm707
        %v709 = vsel %vm708, %v700, %v705
        %v710 = vmul.f32 %v693, %v709
        %v711 = vperm.slane %v343, 2
        %v712 = vmul.f32 %v710, %v711
        %v713 = vperm.slane %v343, 3
        %v714 = vadd.f32 %v712, %v713
        %v715 = vld [vmem:[#allocation9] sm:$0xff]
        %v716 = vld [vmem:[#allocation9 + $0x8] sm:$0xff]
        %v717 = vld [vmem:[#allocation9 + $0x10] sm:$0xff]
        %v718 = vld [vmem:[#allocation9 + $0x18] sm:$0xff]
        %v719 = vperm.slane %v343, 4
        %v721 = vsel %vm352, %v714, 0
        %723 = vmatpush.msra.mxu0 0.0
        %724 = vmatpush.msra.mxu0 0.0
        %725 = vmatpush.msra.mxu0 0.0
        %726 = vmatpush.msra.mxu0 0.0
        %727 = vmatpush.msra.mxu0 0.0
        %728 = vmatpush.msra.mxu0 0.0
        %729 = vmatpush.msra.mxu0 0.0
        %730 = vmatpush.msra.mxu0 0.0
        %731 = vmatpush.msra.mxu0 0.0
        %732 = vmatpush.msra.mxu0 0.0
        %733 = vmatpush.msra.mxu0 0.0
        %734 = vmatpush.msra.mxu0 0.0
        %735 = vmatpush.msra.mxu0 %v718
        %736 = vmatpush.msra.mxu0 %v717
        %737 = vmatpush.msra.mxu0 %v716
        %738 = vmatpush.msra.mxu0 %v715
        %739 = vmatmul.f32.gmra.mxu0 %v721
        %v740 = vpop.f32.mrf.mxu0
        %v741 = vadd.f32 %v719, %v740
        %742 = vdwg.mxu0
        %v743 = vmax.f32 %v741, 0.0
        %v744 = vld [vmem:[#allocation10] sm:$0xff]
        %v745 = vld [vmem:[#allocation10 + $0x8] sm:$0xff]
        %v746 = vld [vmem:[#allocation10 + $0x10] sm:$0xff]
        %v747 = vld [vmem:[#allocation10 + $0x18] sm:$0xff]
        %v748 = vperm.slane %v343, 5
        %v750 = vsel %vm352, %v743, 0
        %752 = vmatpush.msra.mxu0 0.0
        %753 = vmatpush.msra.mxu0 0.0
        %754 = vmatpush.msra.mxu0 0.0
        %755 = vmatpush.msra.mxu0 0.0
        %756 = vmatpush.msra.mxu0 0.0
        %757 = vmatpush.msra.mxu0 0.0
        %758 = vmatpush.msra.mxu0 0.0
        %759 = vmatpush.msra.mxu0 0.0
        %760 = vmatpush.msra.mxu0 0.0
        %761 = vmatpush.msra.mxu0 0.0
        %762 = vmatpush.msra.mxu0 0.0
        %763 = vmatpush.msra.mxu0 0.0
        %764 = vmatpush.msra.mxu0 %v747
        %765 = vmatpush.msra.mxu0 %v746
        %766 = vmatpush.msra.mxu0 %v745
        %767 = vmatpush.msra.mxu0 %v744
        %768 = vmatmul.f32.gmra.mxu0 %v750
        %v769 = vpop.f32.mrf.mxu0
        %v770 = vadd.f32 %v748, %v769
        %771 = vdwg.mxu0
        %v772 = vadd.f32 %v770, %v714
        %v773 = vsel %vm352, %v772, 0.0
        %774 = vadd.xlane.f32.xlu0 %v773
        %v775 = vpop.xlane.xlu0 %774
        %v776 = vmul.f32 %v775, %v691
        %v777 = vsub.f32 %v772, %v776
        %v778 = vmul.f32 %v777, %v777
        %v779 = vsel %vm352, %v778, 0.0
        %780 = vadd.xlane.f32.xlu0 %v779
        %v781 = vpop.xlane.xlu0 %780
        %v782 = vmul.f32 %v781, %v691
        %v783 = vadd.f32 %v782, 1e-05
        %v784 = vrsqrt.pop %v783
        %v785 = vmul.f32 %v784, %v783
        %v786 = vmul.f32 %v785, %v784
        %v787 = vmul.f32 0.5, %v786
        %v788 = vsub.f32 1.5, %v787
        %v789 = vmul.f32 %v784, %v788
        %vm790 = vweird.f32 %v783
        %vm791 = vweird.f32 %v784
        %vm792 = vmor %vm790, %vm791
        %v793 = vsel %vm792, %v784, %v789
        %v794 = vmul.f32 %v777, %v793
        %v795 = vperm.slane %v343, 6
        %v796 = vmul.f32 %v794, %v795
        %v797 = vperm.slane %v343, 7
        %v798 = vadd.f32 %v796, %v797
        %799 = vst.msk [vmem:[%s341] sm:$0xff] %vm352, %v798
        %s800 = sand.u32 %s173, 1
        %s801 = scalar_lea.sflag [#allocation6], %s800
        %s802 = sand.u32 %s173, 1
        %s803 = smul.addr %s802, 8
        %s804 = scalar_lea.vmem [#allocation13], %s803
        // Predicated region
        $region65: #{tpu_custom_call.1} parent=43 // pred_check
          %p805 = pneg %p183
        $region66: #{tpu_custom_call.1} parent=43 // pred_check_branch
          %807 = sbr.rel (%p805) target = $region68
        $region67: #{tpu_custom_call.1} parent=43 // pred_region
          %809 = vsyncadd %s801, 0
          %s810 = smul.addr %s34, 8
          %s811 = scalar_lea.hbm %s7, %s810
          %s813 = sshll.u32 %s804, 4
          %s814 = int_to_ptr.vmem [resolvable:$true] %s813
          %s815 = sshll.u32 %s811, 4
          %s816 = int_to_ptr.hbm [resolvable:$true] %s815
          %818 = dma.vmem_to_hbm [thread:$0]  %s814, 128, %s816, %s801
        $region68: #{tpu_custom_call.1} parent=43 // pred_fallthru
          _
      $region44: #{tpu_custom_call.1} parent=5 // pred_fallthru
        _
      %p819 = scmp.le.s32.totalorder 2, %s29
      // Predicated region
      $region69: #{tpu_custom_call.1} parent=5 // pred_check
        %p820 = pneg %p819
      $region70: #{tpu_custom_call.1} parent=5 // pred_check_branch
        %822 = sbr.rel (%p820) target = $region72
      $region71: #{tpu_custom_call.1} parent=5 // pred_region
        %s823 = ssub.s32 %s29, 2
        // Predicated region
        $region73: #{tpu_custom_call.1} parent=71 // pred_check
          %p824 = pneg %p189
        $region74: #{tpu_custom_call.1} parent=71 // pred_check_branch
          %826 = sbr.rel (%p824) target = $region76
        $region75: #{tpu_custom_call.1} parent=71 // pred_region
          %s827 = sand.u32 %s174, 1
          %s828 = scalar_lea.sflag [#allocation6], %s827
          %s829 = sand.u32 %s174, 1
          %s830 = smul.addr %s829, 8
          %s831 = scalar_lea.vmem [#allocation13], %s830
          %833 = dma.done %s828, 128
        $region76: #{tpu_custom_call.1} parent=71 // pred_fallthru
          _
      $region72: #{tpu_custom_call.1} parent=5 // pred_fallthru
        _
    $region6: #{tpu_custom_call.1} parent=1 // loop_footer
      %s33 = sadd.s32 1, %s29
    $region7: #{tpu_custom_call.1} parent=1 // loop_footer_branch
      %28 = sbr.rel target = $region3
    $region8: #{tpu_custom_call.1} parent=1 // loop_exit
      _
    %834 = vsyncpa [#allocation5], 1
    %s835 = scalar_lea.sflag [#allocation5], 1
    %836 = vsyncpa %s835, 1
    %837 = vsyncpa [#allocation8], 1
    %838 = vsyncpa [#allocation11], 1
    %839 = vsyncpa [#allocation6], 1
    %s840 = scalar_lea.sflag [#allocation6], 1
    %841 = vsyncpa %s840, 1

</llo_original>
